<compile_context>
chip_gen: v7x
topology: tpu7x:2x2x1
jax: 0.10.0
libtpu: 0.0.40
codegen_flags: <defaults>
</compile_context>

<pallas_src>
import jax
import jax.numpy as jnp
from jax.experimental import pallas as pl
from jax.experimental.pallas import tpu as pltpu


# ------------------------------- kernels ----------------------------------- #

def _cls_kernel(h_ref, o_ref):
    # h_ref: (TB, St, H) — only sublane 0 (the [CLS] token) is used.
    # o_ref: (TB, 1, H)
    o_ref[...] = h_ref[:, 0:1, :]


def _wavg1_kernel(w_ref, h_ref, o_ref):
    # w_ref: (TB, S, 1) f32 normalized mask weights (mask / seq_len)
    # h_ref: (TB, S, H)   o_ref: (TB, 1, H)
    acc = jnp.sum(h_ref[...].astype(jnp.float32) * w_ref[...],
                  axis=1, keepdims=True)
    o_ref[...] = acc.astype(o_ref.dtype)


def _wavg2_kernel(w_ref, h1_ref, h2_ref, o_ref):
    # masked mean over seq of the elementwise average of two layers (f32 accum)
    h = (h1_ref[...].astype(jnp.float32) + h2_ref[...].astype(jnp.float32)) * 0.5
    acc = jnp.sum(h * w_ref[...], axis=1, keepdims=True)
    o_ref[...] = acc.astype(o_ref.dtype)


# --------------------------- sizing helpers --------------------------------- #

def _vmem_limit_bytes():
    """Scoped-VMEM limit: half of physical VMEM (128 MiB v5e/v6e -> 64 MiB,
    64 MiB v7x -> 32 MiB), with a safe fallback if the query is unavailable."""
    try:
        cap = pltpu.get_tpu_info().vmem_capacity_bytes
    except Exception:
        cap = 64 << 20
    return int(min(cap // 2, 64 << 20))


def _pick_tb(batch, per_row_bytes, vmem_limit):
    """Rows per grid step so that the double-buffered pipeline fits in ~75% of
    the scoped VMEM limit, while keeping >= 2 grid steps (v7x megacore)."""
    budget = int(0.75 * vmem_limit)
    tb = max(1, budget // (2 * per_row_bytes))   # x2: input/output double buffers
    tb = min(tb, 128, batch)
    if batch > 1:
        tb = min(tb, max(1, pl.cdiv(batch, 2)))
    return int(tb)


# ------------------------------- wrapper ------------------------------------ #

def pooler_forward(pooler_type, attention_mask, last_hidden_state,
                   hidden_states=None):
    """JAX/Pallas equivalent of Pooler.forward.

    attention_mask:    [B, S]  (1 = real token, 0 = pad)
    last_hidden_state: [B, S, H]
    hidden_states:     tuple of [B, S, H] (layer 0 = embeddings, ..., last)
    returns:           [B, H]
    """
    assert pooler_type in ('cls', 'cls_before_pooler', 'avg', 'avg_top2',
                           'avg_first_last'), pooler_type

    B, S, H = last_hidden_state.shape
    dtype = last_hidden_state.dtype
    isz = jnp.dtype(dtype).itemsize
    vmem_limit = _vmem_limit_bytes()

    if pooler_type in ('cls', 'cls_before_pooler'):
        # NOTE: matches the reference module exactly — for 'cls' the original
        # BERT MLP pooler is applied *outside* this module.
        # Sublane-minimal seq tile (8 rows f32 / 16 rows bf16 / 32 rows int8):
        st = min(S, max(8, 32 // isz))
        per_row = st * H * isz + 8 * H * isz          # input tile + output tile
        tb = _pick_tb(B, per_row, vmem_limit)
        out = pl.pallas_call(
            _cls_kernel,
            out_shape=jax.ShapeDtypeStruct((B, 1, H), dtype),
            grid=(pl.cdiv(B, tb),),
            in_specs=[pl.BlockSpec((tb, st, H), lambda b: (b, 0, 0))],
            out_specs=pl.BlockSpec((tb, 1, H), lambda b: (b, 0, 0)),
            compiler_params=pltpu.CompilerParams(
                dimension_semantics=("parallel",),
                vmem_limit_bytes=vmem_limit),
        )(last_hidden_state)
        return out.reshape(B, H)

    # avg-family: fold the denominator into normalized per-token f32 weights
    # outside the kernel (removes the per-step XLU den-reduce and divide).
    # Fully padded rows give nan, identical to the reference's 0/0.
    am = attention_mask.astype(jnp.float32)
    weights = (am / am.sum(-1, keepdims=True))[..., None]   # (B, S, 1) f32

    if pooler_type == 'avg':
        hiddens = (last_hidden_state,)
        kernel = _wavg1_kernel
    elif pooler_type == 'avg_first_last':
        hiddens = (hidden_states[0], hidden_states[-1])
        kernel = _wavg2_kernel
    else:  # 'avg_top2'
        hiddens = (hidden_states[-1], hidden_states[-2])
        kernel = _wavg2_kernel

    n_h = len(hiddens)
    # per-row VMEM: hidden tiles + (S,1) weight block (lane-padded to 128) + out
    per_row = n_h * S * H * isz + S * 128 * 4 + 8 * H * isz
    tb = _pick_tb(B, per_row, vmem_limit)

    h_spec = pl.BlockSpec((tb, S, H), lambda b: (b, 0, 0))
    w_spec = pl.BlockSpec((tb, S, 1), lambda b: (b, 0, 0))

    out = pl.pallas_call(
        kernel,
        out_shape=jax.ShapeDtypeStruct((B, 1, H), dtype),
        grid=(pl.cdiv(B, tb),),
        in_specs=[w_spec] + [h_spec] * n_h,
        out_specs=pl.BlockSpec((tb, 1, H), lambda b: (b, 0, 0)),
        compiler_params=pltpu.CompilerParams(
            dimension_semantics=("parallel",),
            vmem_limit_bytes=vmem_limit),
    )(weights, *hiddens)
    return out.reshape(B, H)


# --------------------------- pure-JAX reference ---------------------------- #

def _ref_forward(pooler_type, attention_mask, last_hidden, hidden_states):
    am = attention_mask.astype(last_hidden.dtype)
    if pooler_type in ('cls', 'cls_before_pooler'):
        return last_hidden[:, 0]
    if pooler_type == 'avg':
        return (last_hidden * am[..., None]).sum(1) / am.sum(-1)[..., None]
    if pooler_type == 'avg_first_last':
        h = (hidden_states[0] + hidden_states[-1]) / 2.0
        return (h * am[..., None]).sum(1) / am.sum(-1)[..., None]
    if pooler_type == 'avg_top2':
        h = (hidden_states[-1] + hidden_states[-2]) / 2.0
        return (h * am[..., None]).sum(1) / am.sum(-1)[..., None]
    raise NotImplementedError


# --------------------------------- main ------------------------------------ #

if __name__ == "__main__":
    B, S, H = 2, 8, 32
    n_layers = 4  # hidden_states: embeddings + 3 layers

    key = jax.random.PRNGKey(0)
    k_h, _ = jax.random.split(key)
    hidden_states = tuple(
        jax.random.normal(jax.random.fold_in(k_h, i), (B, S, H), dtype=jnp.float32)
        for i in range(n_layers)
    )
    last_hidden_state = hidden_states[-1]

    # attention mask with some padding at the end of each sequence
    lengths = jnp.array([S, S - 3], dtype=jnp.int32)
    attention_mask = (jnp.arange(S)[None, :] < lengths[:, None]).astype(jnp.int32)

    ok = True
    for ptype in ['cls', 'cls_before_pooler', 'avg', 'avg_first_last', 'avg_top2']:
        out = pooler_forward(ptype, attention_mask, last_hidden_state, hidden_states)
        out = jax.block_until_ready(out)
        ref = _ref_forward(ptype, attention_mask, last_hidden_state, hidden_states)
        if out.shape != (B, H) or not jnp.allclose(out, ref, atol=1e-5, rtol=1e-5):
            ok = False
            print(f"MISMATCH for pooler_type={ptype}")

    if ok:
        print("KERNEL_OK")
</pallas_src>

<mosaic_0001>
module attributes {stable_mosaic.version = 11 : i64} {
  func.func @_cls_kernel(%arg0: i32, %arg1: memref<1x8x32xf32, #tpu.memory_space<vmem>>, %arg2: memref<1x1x32xf32, #tpu.memory_space<vmem>>) attributes {dimension_semantics = [#tpu.dimension_semantics<parallel>], iteration_bounds = array<i64: 2>, scalar_prefetch = 0 : i64, scratch_operands = 0 : i64, tpu.core_type = #tpu.core_type<tc>, window_params = [{transform_indices = @transform_0, window_bounds = array<i64: 1, 8, 32>}, {transform_indices = @transform_1, window_bounds = array<i64: 1, 1, 32>}]} {
    %c0 = arith.constant 0 : index
    %c0_0 = arith.constant 0 : index
    %c0_1 = arith.constant 0 : index
    %0 = vector.load %arg1[%c0, %c0_0, %c0_1] : memref<1x8x32xf32, #tpu.memory_space<vmem>>, vector<1x1x32xf32>
    %c0_2 = arith.constant 0 : index
    %c0_3 = arith.constant 0 : index
    %c0_4 = arith.constant 0 : index
    %1 = vector.load %arg2[%c0_2, %c0_3, %c0_4] : memref<1x1x32xf32, #tpu.memory_space<vmem>>, vector<1x1x32xf32>
    tpu.vector_store %arg2[%c0_2, %c0_3, %c0_4], %0 {strides = array<i32>} : memref<1x1x32xf32, #tpu.memory_space<vmem>>, vector<1x1x32xf32>,
    return
  }
  func.func @transform_0(%arg0: i32) -> (i32, i32, i32) {
    %c0_i32 = arith.constant 0 : i32
    %c0_i32_0 = arith.constant 0 : i32
    %c0_i32_1 = arith.constant 0 : i32
    return %arg0, %c0_i32, %c0_i32_0 : i32, i32, i32
  }
  func.func @transform_1(%arg0: i32) -> (i32, i32, i32) {
    %c0_i32 = arith.constant 0 : i32
    %c0_i32_0 = arith.constant 0 : i32
    %c0_i32_1 = arith.constant 0 : i32
    return %arg0, %c0_i32, %c0_i32_0 : i32, i32, i32
  }
}

</mosaic_0001>

<llo_original>
// kernel: tpu_custom_call.1
$region0: #{tpu_custom_call.1}
  #allocation0 [shape = 'u32[]', space=smem, size = 0x4, offset = 0x4, fixed_abs, tag = 'smem constant byte address 0x4 - core index']
  #allocation1 [shape = 'u32[144,128]{1,0:T(1,128)}', space=vmem, size = 0x12000, scoped, tag = 'internal scratch']
  %s0 = inlined_call_operand.hbm [shape: f32[2,8,32], index: 0, kind: input, shape index: {}]
  %s1 = inlined_call_operand.hbm [shape: f32[2,1,32], index: 1, kind: output, shape index: {}]
  %s2 = sld [smem:[#allocation0]]
  $region41: #{tpu_custom_call.1} parent=0
    _
  %s4 = ssub.s32 1, %s2
  %s5 = scalar_select 0, %s4, %s2
  $region1: #{tpu_custom_call.1} parent=0
    #allocation2 [shape = 'u8[8192]{0}', space=vmem, size = 0x2000, scoped, tag = 'input window, operand 0']
    #allocation3 [shape = 's32[2]{0}', space=sflag, size = 0x8, scoped, tag = 'scoped memory for tpu_custom_call.1']
    #allocation4 [shape = 's32[2]{0}', space=sflag, size = 0x8, scoped, tag = 'scoped memory for tpu_custom_call.1']
    #allocation5 [shape = 'u8[1024]{0}', space=vmem, size = 0x400, scoped, tag = 'output window, operand 0']
    %6 = vsyncpa [#allocation3], 0
    %s7 = scalar_lea.sflag [#allocation3], 1
    %8 = vsyncpa %s7, 0
    %9 = vsyncpa [#allocation4], 0
    %s10 = scalar_lea.sflag [#allocation4], 1
    %11 = vsyncpa %s10, 0
    loop: start=0, step=1, limit=4
    $region2: #{tpu_custom_call.1} parent=1 // loop_pre_header
      _
    $region3: #{tpu_custom_call.1} parent=1 // loop_header
      %s13 = sphi 0, %s17
      %p14 = scmp.ge.s32.totalorder %s13, 4
      %s23 = sphi 0, %s25
      %s26 = sphi 0, %s23
      %s27 = sphi 0, %s26
      %s43 = sphi 0, %s27
      %s49 = sphi 0, %s51
      %s52 = sphi 0, %s49
      %s53 = sphi 0, %s52
      %s69 = sphi 0, %s53
    $region4: #{tpu_custom_call.1} parent=1 // loop_header_branch
      %16 = sbr.rel (%p14) target = $region8
    $region5: #{tpu_custom_call.1} parent=1 // loop_body
      %s18 = ssub.s32 %s13, 1
      %s19 = ssub.s32 %s13, 2
      %s20 = sadd.s32 %s13, 1
      %s21 = ssub.s32 %s13, %s20
      %p22 = scmp.eq.s32.totalorder %s21, 0
      %s24 = sadd.s32 %s23, 1
      %s25 = scalar_select %p22, %s23, %s24
      %p28 = pneg %p22
      %p29 = scmp.eq.s32.totalorder %s13, 1
      %p30 = por %p28, %p29
      %p31 = scmp.ne.s32.totalorder %s23, %s26
      %p32 = scmp.eq.s32.totalorder %s13, 0
      %p33 = por %p31, %p32
      %p34 = scmp.ne.s32.totalorder %s23, %s26
      %p35 = scmp.eq.s32.totalorder %s18, 1
      %p36 = por %p34, %p35
      %p37 = scmp.ne.s32.totalorder %s26, %s27
      %p38 = scmp.eq.s32.totalorder %s18, 0
      %p39 = por %p37, %p38
      %p40 = scmp.ne.s32.totalorder %s26, %s27
      %p41 = scmp.eq.s32.totalorder %s19, 1
      %p42 = por %p40, %p41
      %p44 = scmp.ne.s32.totalorder %s27, %s43
      %p45 = scmp.eq.s32.totalorder %s19, 0
      %p46 = por %p44, %p45
      %s47 = ssub.s32 %s13, %s20
      %p48 = scmp.eq.s32.totalorder %s47, 0
      %s50 = sadd.s32 %s49, 1
      %s51 = scalar_select %p48, %s49, %s50
      %p54 = pneg %p48
      %p55 = scmp.eq.s32.totalorder %s13, 1
      %p56 = por %p54, %p55
      %p57 = scmp.ne.s32.totalorder %s49, %s52
      %p58 = scmp.eq.s32.totalorder %s13, 0
      %p59 = por %p57, %p58
      %p60 = scmp.ne.s32.totalorder %s49, %s52
      %p61 = scmp.eq.s32.totalorder %s18, 1
      %p62 = por %p60, %p61
      %p63 = scmp.ne.s32.totalorder %s52, %s53
      %p64 = scmp.eq.s32.totalorder %s18, 0
      %p65 = por %p63, %p64
      %p66 = scmp.ne.s32.totalorder %s52, %s53
      %p67 = scmp.eq.s32.totalorder %s19, 1
      %p68 = por %p66, %p67
      %p70 = scmp.ne.s32.totalorder %s53, %s69
      %p71 = scmp.eq.s32.totalorder %s19, 0
      %p72 = por %p70, %p71
      %p73 = scmp.le.s32.totalorder 1, %s13
      %p74 = scmp.lt.s32.totalorder %s13, 3
      %p75 = pnand %p73, %p74
      %p76 = pneg %p75
      // Predicated region
      $region9: #{tpu_custom_call.1} parent=5 // pred_check
        _
      $region10: #{tpu_custom_call.1} parent=5 // pred_check_branch
        %78 = sbr.rel (%p75) target = $region12
      $region11: #{tpu_custom_call.1} parent=5 // pred_region
        %s79 = ssub.s32 %s13, 1
      $region12: #{tpu_custom_call.1} parent=5 // pred_fallthru
        _
      %p80 = scmp.lt.s32.totalorder %s13, 2
      // Predicated region
      $region13: #{tpu_custom_call.1} parent=5 // pred_check
        %p81 = pneg %p80
      $region14: #{tpu_custom_call.1} parent=5 // pred_check_branch
        %83 = sbr.rel (%p81) target = $region16
      $region15: #{tpu_custom_call.1} parent=5 // pred_region
        // Predicated region
        $region17: #{tpu_custom_call.1} parent=15 // pred_check
          %p84 = pneg %p33
        $region18: #{tpu_custom_call.1} parent=15 // pred_check_branch
          %86 = sbr.rel (%p84) target = $region20
        $region19: #{tpu_custom_call.1} parent=15 // pred_region
          %s87 = sand.u32 %s23, 1
          %s88 = scalar_lea.sflag [#allocation3], %s87
          %s89 = sand.u32 %s23, 1
          %s90 = smul.addr %s89, 8
          %s91 = scalar_lea.vmem [#allocation2], %s90
          %s93 = ssub.s32 128, 128
          %94 = vsyncadd %s88, %s93
          %s95 = smul.addr %s13, 128
          %s96 = scalar_lea.hbm %s0, %s95
          %s98 = sshll.u32 %s91, 4
          %s99 = int_to_ptr.vmem [resolvable:$true] %s98
          %101 = dma.hbm_to_vmem [thread:$0]  %s96, 128, %s99, %s88
        $region20: #{tpu_custom_call.1} parent=15 // pred_fallthru
          _
      $region16: #{tpu_custom_call.1} parent=5 // pred_fallthru
        _
      %p102 = scmp.le.s32.totalorder 1, %s13
      %p103 = scmp.lt.s32.totalorder %s13, 3
      %p104 = pnand %p102, %p103
      %p105 = pneg %p104
      // Predicated region
      $region21: #{tpu_custom_call.1} parent=5 // pred_check
        _
      $region22: #{tpu_custom_call.1} parent=5 // pred_check_branch
        %107 = sbr.rel (%p104) target = $region24
      $region23: #{tpu_custom_call.1} parent=5 // pred_region
        %s108 = ssub.s32 %s13, 1
        %s109 = sand.u32 %s26, 1
        %s110 = scalar_lea.sflag [#allocation3], %s109
        %s111 = sand.u32 %s26, 1
        %s112 = smul.addr %s111, 8
        %s113 = scalar_lea.vmem [#allocation2], %s112
        // Predicated region
        $region25: #{tpu_custom_call.1} parent=23 // pred_check
          %p114 = pneg %p39
        $region26: #{tpu_custom_call.1} parent=23 // pred_check_branch
          %116 = sbr.rel (%p114) target = $region28
        $region27: #{tpu_custom_call.1} parent=23 // pred_region
          %117 = dma.done %s110, 128
        $region28: #{tpu_custom_call.1} parent=23 // pred_fallthru
          _
        %s118 = sand.u32 %s26, 1
        %s119 = scalar_lea.sflag [#allocation3], %s118
        %s120 = sand.u32 %s26, 1
        %s121 = smul.addr %s120, 8
        %s122 = scalar_lea.vmem [#allocation2], %s121
        %p123 = pneg %p39
        %p124 = pneg %p36
        %p125 = pneg %p65
        %p126 = pneg %p62
        %s127 = sand.u32 %s52, 1
        %s128 = scalar_lea.sflag [#allocation4], %s127
        %s129 = sand.u32 %s52, 1
        %s130 = scalar_lea.vmem [#allocation5], %s129
        %v131 = vld [vmem:[%s113] sm:$0x1]
        %vm132 = vcmask 253952
        %133 = vst.msk [vmem:[%s130] sm:$0x1] %vm132, %v131
        %s134 = sand.u32 %s52, 1
        %s135 = scalar_lea.sflag [#allocation4], %s134
        %s136 = sand.u32 %s52, 1
        %s137 = scalar_lea.vmem [#allocation5], %s136
        // Predicated region
        $region29: #{tpu_custom_call.1} parent=23 // pred_check
          %p138 = pneg %p62
        $region30: #{tpu_custom_call.1} parent=23 // pred_check_branch
          %140 = sbr.rel (%p138) target = $region32
        $region31: #{tpu_custom_call.1} parent=23 // pred_region
          %s142 = ssub.s32 16, 16
          %143 = vsyncadd %s135, %s142
          %s144 = smul.addr %s18, 16
          %s145 = scalar_lea.hbm %s1, %s144
          %s147 = sshll.u32 %s137, 4
          %s148 = int_to_ptr.vmem [resolvable:$true] %s147
          %150 = dma.vmem_to_hbm [thread:$0]  %s148, 16, %s145, %s135
        $region32: #{tpu_custom_call.1} parent=23 // pred_fallthru
          _
      $region24: #{tpu_custom_call.1} parent=5 // pred_fallthru
        _
      %p151 = scmp.le.s32.totalorder 2, %s13
      // Predicated region
      $region33: #{tpu_custom_call.1} parent=5 // pred_check
        %p152 = pneg %p151
      $region34: #{tpu_custom_call.1} parent=5 // pred_check_branch
        %154 = sbr.rel (%p152) target = $region36
      $region35: #{tpu_custom_call.1} parent=5 // pred_region
        %s155 = ssub.s32 %s13, 2
        // Predicated region
        $region37: #{tpu_custom_call.1} parent=35 // pred_check
          %p156 = pneg %p68
        $region38: #{tpu_custom_call.1} parent=35 // pred_check_branch
          %158 = sbr.rel (%p156) target = $region40
        $region39: #{tpu_custom_call.1} parent=35 // pred_region
          %s159 = sand.u32 %s53, 1
          %s160 = scalar_lea.sflag [#allocation4], %s159
          %s161 = sand.u32 %s53, 1
          %s162 = scalar_lea.vmem [#allocation5], %s161
          %163 = dma.done %s160, 16
        $region40: #{tpu_custom_call.1} parent=35 // pred_fallthru
          _
      $region36: #{tpu_custom_call.1} parent=5 // pred_fallthru
        _
    $region6: #{tpu_custom_call.1} parent=1 // loop_footer
      %s17 = sadd.s32 1, %s13
    $region7: #{tpu_custom_call.1} parent=1 // loop_footer_branch
      %12 = sbr.rel target = $region3
    $region8: #{tpu_custom_call.1} parent=1 // loop_exit
      _
    %164 = vsyncpa [#allocation3], 1
    %s165 = scalar_lea.sflag [#allocation3], 1
    %166 = vsyncpa %s165, 1
    %167 = vsyncpa [#allocation4], 1
    %s168 = scalar_lea.sflag [#allocation4], 1
    %169 = vsyncpa %s168, 1

</llo_original>
